<compile_context>
chip_gen: v6e
topology: v6e:2x2x1
jax: 0.10.0
libtpu: 0.0.40
codegen_flags: <defaults>
</compile_context>

<pallas_src>
import math
import numpy as np

import jax
import jax.numpy as jnp
from jax.experimental import pallas as pl
from jax.experimental.pallas import tpu as pltpu


# ----------------------------------------------------------------------------
# helpers (ports of the PyTorch module helpers)
# ----------------------------------------------------------------------------
def to_list(x, n):
    if isinstance(x, (list, tuple)):
        assert len(x) == n, (x, n)
        return list(x)
    return [x] * n


def _pad_amounts(side, size):
    """(front, end) padding for one dim — same rules as PyTorch Pad.forward."""
    if side is None or size < 1:
        assert size == 0, size
        return (0, 0)
    if side == 'front':
        return (size, 0)
    if side == 'both':
        return (size // 2, math.ceil(size / 2))
    if side == 'end':
        return (0, size)
    raise ValueError(f'pad side {side} unknown')


# ----------------------------------------------------------------------------
# VMEM / grid sizing (tile-padded accounting + per-generation tuning)
# ----------------------------------------------------------------------------
def _round_up(x, m):
    return -(-x // m) * m


def _sublane_multiple(dtype):
    # 8 rows per vreg for 32-bit, 16 for 16-bit, 32 for 8-bit dtypes.
    return max(8, 32 // np.dtype(dtype).itemsize)


def _padded_tile_bytes(rows, cols, dtype):
    """Physical VMEM bytes of a (rows, cols) tile after (sublane, 128) tiling."""
    it = np.dtype(dtype).itemsize
    return _round_up(rows, _sublane_multiple(dtype)) * _round_up(cols, 128) * it


def _tpu_tuning():
    """(vmem budget bytes for double-buffered blocks, minimum grid steps)."""
    kind = ""
    try:
        kind = jax.devices()[0].device_kind.lower()
    except Exception:
        pass
    is_v5e = any(s in kind for s in ("v5e", "v5 lite", "v5lite"))
    is_v6e = any(s in kind for s in ("v6e", "v6 lite", "v6lite"))
    if is_v5e:
        return 12 << 20, 1       # 16 MiB default scoped VMEM, single TC
    if is_v6e:
        return 24 << 20, 1       # 32 MiB default scoped VMEM, single TC
    # v7x / megacore / unknown: keep headroom on 64 MiB VMEM, shard across TCs.
    return 16 << 20, 2


def _choose_block(n, per_item_bytes, budget_bytes, min_grid, sub_multiple=1):
    """Items per grid step so double-buffered blocks fit `budget_bytes` while
    keeping at least `min_grid` grid steps (for megacore sharding)."""
    tb = max(1, int(budget_bytes // max(per_item_bytes, 1)))
    if min_grid > 1:
        tb = min(tb, max(1, pl.cdiv(n, min_grid)))
    tb = min(tb, n)
    if sub_multiple > 1 and tb < n:
        # second-to-last block dim must be a multiple of the sublane tile
        # (or equal the full array dim).
        tb = max(sub_multiple, (tb // sub_multiple) * sub_multiple)
        tb = min(tb, n)
    return int(tb)


# ----------------------------------------------------------------------------
# Pallas kernels
# ----------------------------------------------------------------------------
def _make_pad2d_kernel(T, To, pt0):
    """Pad rows (tb, T) -> (tb, To); rows map densely to sublanes."""

    def kernel(x_ref, o_ref):
        if To == T:
            o_ref[...] = x_ref[...]
            return
        # zero fill (provides tail padding + roll wrap-around zeros),
        # drop the input in at lane offset 0, shift into final lane position.
        o_ref[...] = jnp.zeros(o_ref.shape, o_ref.dtype)
        o_ref[:, 0:T] = x_ref[...]
        if pt0 > 0:
            o_ref[...] = pltpu.roll(o_ref[...], pt0, 1)

    return kernel


def _make_pad3d_kernel(F, T, Fo, To, pf0, pt0):
    """Pad planes (tb, F, T) -> (tb, Fo, To), input at (pf0, pt0)."""
    pf1 = Fo - F - pf0

    def kernel(x_ref, o_ref):
        tb = o_ref.shape[0]
        dt = o_ref.dtype
        # 1) zero only the pure-padding sublane bands (one dense store each).
        if pf0 > 0:
            o_ref[:, :pf0, :] = jnp.zeros((tb, pf0, To), dt)
        if pf1 > 0:
            o_ref[:, pf0 + F:, :] = jnp.zeros((tb, pf1, To), dt)
        # 2) the F input rows.
        if To == T:
            # no lane padding at all: single dense store.
            o_ref[:, pf0:pf0 + F, :] = x_ref[...]
        else:
            # zero the band (tail zeros + roll wrap-around zeros), drop the
            # input in at lane offset 0, roll only these F rows into place.
            o_ref[:, pf0:pf0 + F, :] = jnp.zeros((tb, F, To), dt)
            o_ref[:, pf0:pf0 + F, 0:T] = x_ref[...]
            if pt0 > 0:
                o_ref[:, pf0:pf0 + F, :] = pltpu.roll(
                    o_ref[:, pf0:pf0 + F, :], pt0, 2)

    return kernel


# ----------------------------------------------------------------------------
# pallas_call wrappers
# ----------------------------------------------------------------------------
def _pad_pallas_2d(x2, pt0, pt1):
    """Zero-pad (N, T) -> (N, To)."""
    N, T = x2.shape
    To = T + pt0 + pt1
    it = np.dtype(x2.dtype).itemsize
    budget, min_grid = _tpu_tuning()
    # padded per-row bytes, x2 for double buffering of input + output blocks.
    per_row = 2 * (_round_up(T, 128) + _round_up(To, 128)) * it
    tb = _choose_block(N, per_row, budget, min_grid,
                       sub_multiple=_sublane_multiple(x2.dtype))

    return pl.pallas_call(
        _make_pad2d_kernel(T, To, pt0),
        grid=(pl.cdiv(N, tb),),
        in_specs=[pl.BlockSpec((tb, T), lambda i: (i, 0))],
        out_specs=pl.BlockSpec((tb, To), lambda i: (i, 0)),
        out_shape=jax.ShapeDtypeStruct((N, To), x2.dtype),
        compiler_params=pltpu.CompilerParams(
            dimension_semantics=("parallel",)),
    )(x2)


def _pad_pallas_3d(x3, pads):
    """Zero-pad (N, F, T) -> (N, Fo, To) with pads = ((pf0, pf1), (pt0, pt1))."""
    N, F, T = x3.shape
    (pf0, pf1), (pt0, pt1) = pads
    Fo, To = F + pf0 + pf1, T + pt0 + pt1

    budget, min_grid = _tpu_tuning()
    per_plane = 2 * (_padded_tile_bytes(F, T, x3.dtype)
                     + _padded_tile_bytes(Fo, To, x3.dtype))
    tb = _choose_block(N, per_plane, budget, min_grid)

    return pl.pallas_call(
        _make_pad3d_kernel(F, T, Fo, To, pf0, pt0),
        grid=(pl.cdiv(N, tb),),
        in_specs=[pl.BlockSpec((tb, F, T), lambda i: (i, 0, 0))],
        out_specs=pl.BlockSpec((tb, Fo, To), lambda i: (i, 0, 0)),
        out_shape=jax.ShapeDtypeStruct((N, Fo, To), x3.dtype),
        compiler_params=pltpu.CompilerParams(
            dimension_semantics=("parallel",)),
    )(x3)


# ----------------------------------------------------------------------------
# Pad module (functional, parameter-free; forward pass only)
# ----------------------------------------------------------------------------
class Pad:
    """Adds padding of a certain size either to front, end or both."""

    def __init__(self, side='both', mode='constant'):
        self.side = side
        self.mode = mode

    def __call__(self, x, size):
        assert x.ndim in [3, 4], x.shape
        n_sp = x.ndim - 2
        sides = to_list(self.side, n_sp)
        sizes = to_list(size, n_sp)
        if not any(np.array(sizes)):
            return x
        if self.mode != 'constant':
            # TODO(synk): only constant (zero) padding is ported to the Pallas
            # kernel; reflect / replicate / circular F.pad modes are not.
            raise NotImplementedError(self.mode)

        pads = [_pad_amounts(s, z) for s, z in zip(sides, sizes)]
        B, C = x.shape[:2]

        if x.ndim == 3:
            T = x.shape[2]
            (pt0, pt1), = pads
            out = _pad_pallas_2d(x.reshape(B * C, T), pt0, pt1)
            return out.reshape(B, C, T + pt0 + pt1)

        F, T = x.shape[2], x.shape[3]
        (pf0, pf1), (pt0, pt1) = pads
        if pf0 == 0 and pf1 == 0:
            # no f-padding: flatten f into the row (sublane) dimension too.
            out = _pad_pallas_2d(x.reshape(B * C * F, T), pt0, pt1)
            return out.reshape(B, C, F, T + pt0 + pt1)
        out = _pad_pallas_3d(x.reshape(B * C, F, T),
                             ((pf0, pf1), (pt0, pt1)))
        return out.reshape(B, C, F + pf0 + pf1, T + pt0 + pt1)


# ----------------------------------------------------------------------------
if __name__ == "__main__":
    key = jax.random.PRNGKey(0)
    k1, k2 = jax.random.split(key)

    # 4-D input (b, c, f, t), pad 'both' sides of both spatial dims (3-D kernel).
    x4 = jax.random.normal(k1, (2, 4, 16, 16), dtype=jnp.float32)
    y4 = jax.block_until_ready(Pad(side='both')(x4, size=(2, 3)))
    ref4 = jnp.pad(x4, ((0, 0), (0, 0), (1, 1), (1, 2)))
    assert y4.shape == (2, 4, 18, 19), y4.shape
    assert np.array_equal(np.asarray(y4), np.asarray(ref4)), "4D 'both' pad mismatch"

    # 4-D input, mixed sides ('front' on f, 'end' on t) — no-roll fast path.
    y4m = jax.block_until_ready(Pad(side=('front', 'end'))(x4, size=(2, 5)))
    ref4m = jnp.pad(x4, ((0, 0), (0, 0), (2, 0), (0, 5)))
    assert y4m.shape == (2, 4, 18, 21), y4m.shape
    assert np.array_equal(np.asarray(y4m), np.asarray(ref4m)), "4D mixed pad mismatch"

    # 4-D input, t-only padding — flattened 2-D path with roll.
    y4t = jax.block_until_ready(Pad(side=(None, 'both'))(x4, size=(0, 4)))
    ref4t = jnp.pad(x4, ((0, 0), (0, 0), (0, 0), (2, 2)))
    assert y4t.shape == (2, 4, 16, 20), y4t.shape
    assert np.array_equal(np.asarray(y4t), np.asarray(ref4t)), "4D t-only pad mismatch"

    # 3-D input (b, c, t), pad 'end' — 2-D kernel, no roll.
    x3 = jax.random.normal(k2, (2, 4, 16), dtype=jnp.float32)
    y3 = jax.block_until_ready(Pad(side='end')(x3, size=8))
    ref3 = jnp.pad(x3, ((0, 0), (0, 0), (0, 8)))
    assert y3.shape == (2, 4, 24), y3.shape
    assert np.array_equal(np.asarray(y3), np.asarray(ref3)), "3D 'end' pad mismatch"

    # 3-D input, pad 'both' — 2-D kernel with roll.
    y3b = jax.block_until_ready(Pad(side='both')(x3, size=5))
    ref3b = jnp.pad(x3, ((0, 0), (0, 0), (2, 3)))
    assert y3b.shape == (2, 4, 21), y3b.shape
    assert np.array_equal(np.asarray(y3b), np.asarray(ref3b)), "3D 'both' pad mismatch"

    # size 0 is a no-op (returns input unchanged, as in the PyTorch module).
    assert Pad(side='both')(x4, size=0) is x4

    print("KERNEL_OK")
</pallas_src>

<mosaic_0001>
module attributes {stable_mosaic.version = 11 : i64} {
  func.func @kernel(%arg0: i32, %arg1: memref<4x16x16xf32, #tpu.memory_space<vmem>>, %arg2: memref<4x18x19xf32, #tpu.memory_space<vmem>>) attributes {dimension_semantics = [#tpu.dimension_semantics<parallel>], iteration_bounds = array<i64: 2>, scalar_prefetch = 0 : i64, scratch_operands = 0 : i64, tpu.core_type = #tpu.core_type<tc>, window_params = [{transform_indices = @transform_0, window_bounds = array<i64: 4, 16, 16>}, {transform_indices = @transform_1, window_bounds = array<i64: 4, 18, 19>}]} {
    %cst = arith.constant 0.000000e+00 : f32
    %0 = vector.broadcast %cst : f32 to vector<4x1x19xf32>
    %c0 = arith.constant 0 : index
    %c0_0 = arith.constant 0 : index
    %c0_1 = arith.constant 0 : index
    %1 = vector.load %arg2[%c0, %c0_0, %c0_1] : memref<4x18x19xf32, #tpu.memory_space<vmem>>, vector<4x1x19xf32>
    tpu.vector_store %arg2[%c0, %c0_0, %c0_1], %0 {strides = array<i32>} : memref<4x18x19xf32, #tpu.memory_space<vmem>>, vector<4x1x19xf32>,
    %cst_2 = arith.constant 0.000000e+00 : f32
    %2 = vector.broadcast %cst_2 : f32 to vector<4x1x19xf32>
    %c0_3 = arith.constant 0 : index
    %c17 = arith.constant 17 : index
    %c0_4 = arith.constant 0 : index
    %3 = vector.load %arg2[%c0_3, %c17, %c0_4] : memref<4x18x19xf32, #tpu.memory_space<vmem>>, vector<4x1x19xf32>
    tpu.vector_store %arg2[%c0_3, %c17, %c0_4], %2 {strides = array<i32>} : memref<4x18x19xf32, #tpu.memory_space<vmem>>, vector<4x1x19xf32>,
    %cst_5 = arith.constant 0.000000e+00 : f32
    %4 = vector.broadcast %cst_5 : f32 to vector<4x16x19xf32>
    %c0_6 = arith.constant 0 : index
    %c1 = arith.constant 1 : index
    %c0_7 = arith.constant 0 : index
    %5 = vector.load %arg2[%c0_6, %c1, %c0_7] : memref<4x18x19xf32, #tpu.memory_space<vmem>>, vector<4x16x19xf32>
    tpu.vector_store %arg2[%c0_6, %c1, %c0_7], %4 {strides = array<i32>} : memref<4x18x19xf32, #tpu.memory_space<vmem>>, vector<4x16x19xf32>,
    %c0_8 = arith.constant 0 : index
    %c0_9 = arith.constant 0 : index
    %c0_10 = arith.constant 0 : index
    %6 = vector.load %arg1[%c0_8, %c0_9, %c0_10] : memref<4x16x16xf32, #tpu.memory_space<vmem>>, vector<4x16x16xf32>
    %c0_11 = arith.constant 0 : index
    %c1_12 = arith.constant 1 : index
    %c0_13 = arith.constant 0 : index
    %7 = vector.load %arg2[%c0_11, %c1_12, %c0_13] : memref<4x18x19xf32, #tpu.memory_space<vmem>>, vector<4x16x16xf32>
    tpu.vector_store %arg2[%c0_11, %c1_12, %c0_13], %6 {strides = array<i32>} : memref<4x18x19xf32, #tpu.memory_space<vmem>>, vector<4x16x16xf32>,
    %c0_14 = arith.constant 0 : index
    %c1_15 = arith.constant 1 : index
    %c0_16 = arith.constant 0 : index
    %8 = vector.load %arg2[%c0_14, %c1_15, %c0_16] : memref<4x18x19xf32, #tpu.memory_space<vmem>>, vector<4x16x19xf32>
    %c1_i32 = arith.constant 1 : i32
    %9 = tpu.dynamic_rotate %8 by %c1_i32 dim 2 : vector<4x16x19xf32>, i32 -> vector<4x16x19xf32>
    %c0_17 = arith.constant 0 : index
    %c1_18 = arith.constant 1 : index
    %c0_19 = arith.constant 0 : index
    %10 = vector.load %arg2[%c0_17, %c1_18, %c0_19] : memref<4x18x19xf32, #tpu.memory_space<vmem>>, vector<4x16x19xf32>
    tpu.vector_store %arg2[%c0_17, %c1_18, %c0_19], %9 {strides = array<i32>} : memref<4x18x19xf32, #tpu.memory_space<vmem>>, vector<4x16x19xf32>,
    return
  }
  func.func @transform_0(%arg0: i32) -> (i32, i32, i32) {
    %c0_i32 = arith.constant 0 : i32
    %c0_i32_0 = arith.constant 0 : i32
    %c0_i32_1 = arith.constant 0 : i32
    return %arg0, %c0_i32, %c0_i32_0 : i32, i32, i32
  }
  func.func @transform_1(%arg0: i32) -> (i32, i32, i32) {
    %c0_i32 = arith.constant 0 : i32
    %c0_i32_0 = arith.constant 0 : i32
    %c0_i32_1 = arith.constant 0 : i32
    return %arg0, %c0_i32, %c0_i32_0 : i32, i32, i32
  }
}

</mosaic_0001>

<llo_original>
// kernel: tpu_custom_call.1
$region0: #{tpu_custom_call.1}
  #allocation0 [shape = 'u32[]', space=smem, size = 0x4, offset = 0x4, fixed_abs, tag = 'smem constant byte address 0x4 - core index']
  #allocation1 [shape = 'u32[144,128]{1,0:T(1,128)}', space=vmem, size = 0x12000, scoped, tag = 'internal scratch']
  %s0 = inlined_call_operand.hbm [shape: f32[8,16,16], index: 0, kind: input, shape index: {}]
  %s1 = inlined_call_operand.vmem [shape: f32[8,18,19], index: 1, kind: output, shape index: {}]
  %s2 = sld [smem:[#allocation0]]
  $region41: #{tpu_custom_call.1} parent=0
    _
  %s4 = ssub.s32 1, %s2
  %s5 = scalar_select 0, %s4, %s2
  $region1: #{tpu_custom_call.1} parent=0
    #allocation2 [shape = 'u8[65536]{0}', space=vmem, size = 0x10000, scoped, tag = 'input window, operand 0']
    #allocation3 [shape = 's32[2]{0}', space=sflag, size = 0x8, scoped, tag = 'scoped memory for tpu_custom_call.1']
    %6 = vsyncpa [#allocation3], 0
    %s7 = scalar_lea.sflag [#allocation3], 1
    %8 = vsyncpa %s7, 0
    loop: start=0, step=1, limit=4
    $region2: #{tpu_custom_call.1} parent=1 // loop_pre_header
      _
    $region3: #{tpu_custom_call.1} parent=1 // loop_header
      %s10 = sphi 0, %s14
      %p11 = scmp.ge.s32.totalorder %s10, 4
      %s20 = sphi 0, %s22
      %s23 = sphi 0, %s20
      %s24 = sphi 0, %s23
      %s40 = sphi 0, %s24
      %s46 = sphi 0, %s48
      %s49 = sphi 0, %s46
      %s50 = sphi 0, %s49
      %s66 = sphi 0, %s50
    $region4: #{tpu_custom_call.1} parent=1 // loop_header_branch
      %13 = sbr.rel (%p11) target = $region8
    $region5: #{tpu_custom_call.1} parent=1 // loop_body
      %s15 = ssub.s32 %s10, 1
      %s16 = ssub.s32 %s10, 2
      %s17 = sadd.s32 %s10, 1
      %s18 = ssub.s32 %s10, %s17
      %p19 = scmp.eq.s32.totalorder %s18, 0
      %s21 = sadd.s32 %s20, 1
      %s22 = scalar_select %p19, %s20, %s21
      %p25 = pneg %p19
      %p26 = scmp.eq.s32.totalorder %s10, 1
      %p27 = por %p25, %p26
      %p28 = scmp.ne.s32.totalorder %s20, %s23
      %p29 = scmp.eq.s32.totalorder %s10, 0
      %p30 = por %p28, %p29
      %p31 = scmp.ne.s32.totalorder %s20, %s23
      %p32 = scmp.eq.s32.totalorder %s15, 1
      %p33 = por %p31, %p32
      %p34 = scmp.ne.s32.totalorder %s23, %s24
      %p35 = scmp.eq.s32.totalorder %s15, 0
      %p36 = por %p34, %p35
      %p37 = scmp.ne.s32.totalorder %s23, %s24
      %p38 = scmp.eq.s32.totalorder %s16, 1
      %p39 = por %p37, %p38
      %p41 = scmp.ne.s32.totalorder %s24, %s40
      %p42 = scmp.eq.s32.totalorder %s16, 0
      %p43 = por %p41, %p42
      %s44 = ssub.s32 %s10, %s17
      %p45 = scmp.eq.s32.totalorder %s44, 0
      %s47 = sadd.s32 %s46, 1
      %s48 = scalar_select %p45, %s46, %s47
      %p51 = pneg %p45
      %p52 = scmp.eq.s32.totalorder %s10, 1
      %p53 = por %p51, %p52
      %p54 = scmp.ne.s32.totalorder %s46, %s49
      %p55 = scmp.eq.s32.totalorder %s10, 0
      %p56 = por %p54, %p55
      %p57 = scmp.ne.s32.totalorder %s46, %s49
      %p58 = scmp.eq.s32.totalorder %s15, 1
      %p59 = por %p57, %p58
      %p60 = scmp.ne.s32.totalorder %s49, %s50
      %p61 = scmp.eq.s32.totalorder %s15, 0
      %p62 = por %p60, %p61
      %p63 = scmp.ne.s32.totalorder %s49, %s50
      %p64 = scmp.eq.s32.totalorder %s16, 1
      %p65 = por %p63, %p64
      %p67 = scmp.ne.s32.totalorder %s50, %s66
      %p68 = scmp.eq.s32.totalorder %s16, 0
      %p69 = por %p67, %p68
      %p70 = scmp.le.s32.totalorder 1, %s10
      %p71 = scmp.lt.s32.totalorder %s10, 3
      %p72 = pnand %p70, %p71
      %p73 = pneg %p72
      // Predicated region
      $region9: #{tpu_custom_call.1} parent=5 // pred_check
        _
      $region10: #{tpu_custom_call.1} parent=5 // pred_check_branch
        %75 = sbr.rel (%p72) target = $region12
      $region11: #{tpu_custom_call.1} parent=5 // pred_region
        %s76 = ssub.s32 %s10, 1
      $region12: #{tpu_custom_call.1} parent=5 // pred_fallthru
        _
      %p77 = scmp.lt.s32.totalorder %s10, 2
      // Predicated region
      $region13: #{tpu_custom_call.1} parent=5 // pred_check
        %p78 = pneg %p77
      $region14: #{tpu_custom_call.1} parent=5 // pred_check_branch
        %80 = sbr.rel (%p78) target = $region16
      $region15: #{tpu_custom_call.1} parent=5 // pred_region
        // Predicated region
        $region17: #{tpu_custom_call.1} parent=15 // pred_check
          %p81 = pneg %p30
        $region18: #{tpu_custom_call.1} parent=15 // pred_check_branch
          %83 = sbr.rel (%p81) target = $region20
        $region19: #{tpu_custom_call.1} parent=15 // pred_region
          %s84 = sand.u32 %s20, 1
          %s85 = scalar_lea.sflag [#allocation3], %s84
          %s86 = sand.u32 %s20, 1
          %s87 = smul.addr %s86, 64
          %s88 = scalar_lea.vmem [#allocation2], %s87
          %s89 = smul.u32 4, %s10
          %s91 = ssub.s32 1024, 1024
          %92 = vsyncadd %s85, %s91
          %s93 = smul.addr %s89, 2
          %s94 = smul.addr %s93, 128
          %s95 = scalar_lea.hbm %s0, %s94
          %s96 = sshll.u32 %s88, 4
          %s97 = int_to_ptr.vmem [resolvable:$true] %s96
          %102 = dma.hbm_to_vmem [thread:$0]  %s95, 1024, %s97, %s85, 128, 128, 8
        $region20: #{tpu_custom_call.1} parent=15 // pred_fallthru
          _
      $region16: #{tpu_custom_call.1} parent=5 // pred_fallthru
        _
      %p103 = scmp.le.s32.totalorder 1, %s10
      %p104 = scmp.lt.s32.totalorder %s10, 3
      %p105 = pnand %p103, %p104
      %p106 = pneg %p105
      // Predicated region
      $region21: #{tpu_custom_call.1} parent=5 // pred_check
        _
      $region22: #{tpu_custom_call.1} parent=5 // pred_check_branch
        %108 = sbr.rel (%p105) target = $region24
      $region23: #{tpu_custom_call.1} parent=5 // pred_region
        %s109 = ssub.s32 %s10, 1
        %s110 = sand.u32 %s23, 1
        %s111 = scalar_lea.sflag [#allocation3], %s110
        %s112 = sand.u32 %s23, 1
        %s113 = smul.addr %s112, 64
        %s114 = scalar_lea.vmem [#allocation2], %s113
        // Predicated region
        $region25: #{tpu_custom_call.1} parent=23 // pred_check
          %p115 = pneg %p36
        $region26: #{tpu_custom_call.1} parent=23 // pred_check_branch
          %117 = sbr.rel (%p115) target = $region28
        $region27: #{tpu_custom_call.1} parent=23 // pred_region
          %118 = dma.done %s111, 1024
        $region28: #{tpu_custom_call.1} parent=23 // pred_fallthru
          _
        %s119 = sand.u32 %s23, 1
        %s120 = scalar_lea.sflag [#allocation3], %s119
        %s121 = sand.u32 %s23, 1
        %s122 = smul.addr %s121, 64
        %s123 = scalar_lea.vmem [#allocation2], %s122
        %p124 = pneg %p36
        %p125 = pneg %p33
        %p126 = pneg %p62
        %p127 = pneg %p59
        %s128 = smul.u32 4, %s15
        %p129 = scmp.lt.s32.totalorder %s128, 7
        %s130 = scalar_select %p129, %s128, 7
        %s131 = smul.addr %s130, 3
        %s132 = smul.addr %s131, 8
        %s133 = scalar_lea.vmem %s1, %s132
        %s134 = smul.u32 4, %s15
        %s135 = smul.u32 4, %s15
        %p136 = scmp.lt.s32.totalorder %s135, 7
        %s137 = scalar_select %p136, %s135, 7
        %s138 = smul.addr %s137, 3
        %s139 = smul.addr %s138, 8
        %s140 = scalar_lea.vmem %s1, %s139
        %s141 = smul.u32 4, %s15
        %vm142 = vcmask 147456
        %143 = vst.msk [vmem:[%s140] sm:$0x1] %vm142, 0.0
        %144 = vst.msk [vmem:[%s140 + $0x18] sm:$0x1] %vm142, 0.0
        %145 = vst.msk [vmem:[%s140 + $0x30] sm:$0x1] %vm142, 0.0
        %146 = vst.msk [vmem:[%s140 + $0x48] sm:$0x1] %vm142, 0.0
        %147 = vst.msk [vmem:[%s140 + $0x11] sm:$0x1] %vm142, 0.0
        %148 = vst.msk [vmem:[%s140 + $0x29] sm:$0x1] %vm142, 0.0
        %149 = vst.msk [vmem:[%s140 + $0x41] sm:$0x1] %vm142, 0.0
        %150 = vst.msk [vmem:[%s140 + $0x59] sm:$0x1] %vm142, 0.0
        %vm151 = vcmask 154624
        %152 = vst.msk [vmem:[%s140 + $0x1] sm:$0xff] %vm151, 0.0
        %153 = vst.msk [vmem:[%s140 + $0x9] sm:$0xff] %vm151, 0.0
        %154 = vst.msk [vmem:[%s140 + $0x19] sm:$0xff] %vm151, 0.0
        %155 = vst.msk [vmem:[%s140 + $0x21] sm:$0xff] %vm151, 0.0
        %156 = vst.msk [vmem:[%s140 + $0x31] sm:$0xff] %vm151, 0.0
        %157 = vst.msk [vmem:[%s140 + $0x39] sm:$0xff] %vm151, 0.0
        %158 = vst.msk [vmem:[%s140 + $0x49] sm:$0xff] %vm151, 0.0
        %159 = vst.msk [vmem:[%s140 + $0x51] sm:$0xff] %vm151, 0.0
        %v160 = vld [vmem:[%s114] sm:$0xff]
        %v161 = vld [vmem:[%s114 + $0x8] sm:$0xff]
        %v162 = vld [vmem:[%s114 + $0x10] sm:$0xff]
        %v163 = vld [vmem:[%s114 + $0x18] sm:$0xff]
        %v164 = vld [vmem:[%s114 + $0x20] sm:$0xff]
        %v165 = vld [vmem:[%s114 + $0x28] sm:$0xff]
        %v166 = vld [vmem:[%s114 + $0x30] sm:$0xff]
        %v167 = vld [vmem:[%s114 + $0x38] sm:$0xff]
        %vm168 = vcmask 130048
        %169 = vst.msk [vmem:[%s140 + $0x1] sm:$0xff] %vm168, %v160
        %170 = vst.msk [vmem:[%s140 + $0x9] sm:$0xff] %vm168, %v161
        %171 = vst.msk [vmem:[%s140 + $0x19] sm:$0xff] %vm168, %v162
        %172 = vst.msk [vmem:[%s140 + $0x21] sm:$0xff] %vm168, %v163
        %173 = vst.msk [vmem:[%s140 + $0x31] sm:$0xff] %vm168, %v164
        %174 = vst.msk [vmem:[%s140 + $0x39] sm:$0xff] %vm168, %v165
        %175 = vst.msk [vmem:[%s140 + $0x49] sm:$0xff] %vm168, %v166
        %176 = vst.msk [vmem:[%s140 + $0x51] sm:$0xff] %vm168, %v167
        %v177 = vld [vmem:[%s140 + $0x1] sm:$0xff]
        %v178 = vld [vmem:[%s140 + $0x9] sm:$0xff]
        %v179 = vld [vmem:[%s140 + $0x19] sm:$0xff]
        %v180 = vld [vmem:[%s140 + $0x21] sm:$0xff]
        %v181 = vld [vmem:[%s140 + $0x31] sm:$0xff]
        %v182 = vld [vmem:[%s140 + $0x39] sm:$0xff]
        %v183 = vld [vmem:[%s140 + $0x49] sm:$0xff]
        %v184 = vld [vmem:[%s140 + $0x51] sm:$0xff]
        %vm185 = vcmask 1047704
        %186 = vrot.lane.b32.xlu0 %v177, 19
        %v187 = vpop.permute.xlu0 %186
        %v188 = vsel %vm185, %v187, %v177
        %189 = vrot.lane.b32.xlu0 %v178, 19
        %v190 = vpop.permute.xlu0 %189
        %v191 = vsel %vm185, %v190, %v178
        %192 = vrot.lane.b32.xlu0 %v179, 19
        %v193 = vpop.permute.xlu0 %192
        %v194 = vsel %vm185, %v193, %v179
        %195 = vrot.lane.b32.xlu0 %v180, 19
        %v196 = vpop.permute.xlu0 %195
        %v197 = vsel %vm185, %v196, %v180
        %198 = vrot.lane.b32.xlu0 %v181, 19
        %v199 = vpop.permute.xlu0 %198
        %v200 = vsel %vm185, %v199, %v181
        %201 = vrot.lane.b32.xlu0 %v182, 19
        %v202 = vpop.permute.xlu0 %201
        %v203 = vsel %vm185, %v202, %v182
        %204 = vrot.lane.b32.xlu0 %v183, 19
        %v205 = vpop.permute.xlu0 %204
        %v206 = vsel %vm185, %v205, %v183
        %207 = vrot.lane.b32.xlu0 %v184, 19
        %v208 = vpop.permute.xlu0 %207
        %v209 = vsel %vm185, %v208, %v184
        %210 = vrot.lane.b32.xlu0 %v188, 19
        %v211 = vpop.permute.xlu0 %210
        %212 = vrot.lane.b32.xlu0 %v191, 19
        %v213 = vpop.permute.xlu0 %212
        %214 = vrot.lane.b32.xlu0 %v194, 19
        %v215 = vpop.permute.xlu0 %214
        %216 = vrot.lane.b32.xlu0 %v197, 19
        %v217 = vpop.permute.xlu0 %216
        %218 = vrot.lane.b32.xlu0 %v200, 19
        %v219 = vpop.permute.xlu0 %218
        %220 = vrot.lane.b32.xlu0 %v203, 19
        %v221 = vpop.permute.xlu0 %220
        %222 = vrot.lane.b32.xlu0 %v206, 19
        %v223 = vpop.permute.xlu0 %222
        %224 = vrot.lane.b32.xlu0 %v209, 19
        %v225 = vpop.permute.xlu0 %224
        %v226 = vsel %vm185, %v211, %v177
        %v227 = vsel %vm185, %v213, %v178
        %v228 = vsel %vm185, %v215, %v179
        %v229 = vsel %vm185, %v217, %v180
        %v230 = vsel %vm185, %v219, %v181
        %v231 = vsel %vm185, %v221, %v182
        %v232 = vsel %vm185, %v223, %v183
        %v233 = vsel %vm185, %v225, %v184
        %242 = vrot.lane.b32.xlu0 %v226, 110
        %v243 = vpop.permute.xlu0 %242
        %244 = vrot.lane.b32.xlu0 %v227, 110
        %v245 = vpop.permute.xlu0 %244
        %246 = vrot.lane.b32.xlu0 %v228, 110
        %v247 = vpop.permute.xlu0 %246
        %248 = vrot.lane.b32.xlu0 %v229, 110
        %v249 = vpop.permute.xlu0 %248
        %250 = vrot.lane.b32.xlu0 %v230, 110
        %v251 = vpop.permute.xlu0 %250
        %252 = vrot.lane.b32.xlu0 %v231, 110
        %v253 = vpop.permute.xlu0 %252
        %254 = vrot.lane.b32.xlu0 %v232, 110
        %v255 = vpop.permute.xlu0 %254
        %256 = vrot.lane.b32.xlu0 %v233, 110
        %v257 = vpop.permute.xlu0 %256
        %266 = vst.msk [vmem:[%s140 + $0x1] sm:$0xff] %vm151, %v243
        %267 = vst.msk [vmem:[%s140 + $0x9] sm:$0xff] %vm151, %v245
        %268 = vst.msk [vmem:[%s140 + $0x19] sm:$0xff] %vm151, %v247
        %269 = vst.msk [vmem:[%s140 + $0x21] sm:$0xff] %vm151, %v249
        %270 = vst.msk [vmem:[%s140 + $0x31] sm:$0xff] %vm151, %v251
        %271 = vst.msk [vmem:[%s140 + $0x39] sm:$0xff] %vm151, %v253
        %272 = vst.msk [vmem:[%s140 + $0x49] sm:$0xff] %vm151, %v255
        %273 = vst.msk [vmem:[%s140 + $0x51] sm:$0xff] %vm151, %v257
        %s274 = smul.u32 4, %s15
        %p275 = scmp.lt.s32.totalorder %s274, 7
        %s276 = scalar_select %p275, %s274, 7
        %s277 = smul.addr %s276, 3
        %s278 = smul.addr %s277, 8
        %s279 = scalar_lea.vmem %s1, %s278
        // Predicated region
        $region29: #{tpu_custom_call.1} parent=23 // pred_check
          %p280 = pneg %p59
        $region30: #{tpu_custom_call.1} parent=23 // pred_check_branch
          %282 = sbr.rel (%p280) target = $region32
        $region31: #{tpu_custom_call.1} parent=23 // pred_region
          %s283 = smul.u32 4, %s15
        $region32: #{tpu_custom_call.1} parent=23 // pred_fallthru
          _
      $region24: #{tpu_custom_call.1} parent=5 // pred_fallthru
        _
      %p284 = scmp.le.s32.totalorder 2, %s10
      // Predicated region
      $region33: #{tpu_custom_call.1} parent=5 // pred_check
        %p285 = pneg %p284
      $region34: #{tpu_custom_call.1} parent=5 // pred_check_branch
        %287 = sbr.rel (%p285) target = $region36
      $region35: #{tpu_custom_call.1} parent=5 // pred_region
        %s288 = ssub.s32 %s10, 2
        // Predicated region
        $region37: #{tpu_custom_call.1} parent=35 // pred_check
          %p289 = pneg %p65
        $region38: #{tpu_custom_call.1} parent=35 // pred_check_branch
          %291 = sbr.rel (%p289) target = $region40
        $region39: #{tpu_custom_call.1} parent=35 // pred_region
          %s292 = smul.u32 4, %s16
          %p293 = scmp.lt.s32.totalorder %s292, 7
          %s294 = scalar_select %p293, %s292, 7
          %s295 = smul.addr %s294, 3
          %s296 = smul.addr %s295, 8
          %s297 = scalar_lea.vmem %s1, %s296
        $region40: #{tpu_custom_call.1} parent=35 // pred_fallthru
          _
      $region36: #{tpu_custom_call.1} parent=5 // pred_fallthru
        _
    $region6: #{tpu_custom_call.1} parent=1 // loop_footer
      %s14 = sadd.s32 1, %s10
    $region7: #{tpu_custom_call.1} parent=1 // loop_footer_branch
      %9 = sbr.rel target = $region3
    $region8: #{tpu_custom_call.1} parent=1 // loop_exit
      _
    %298 = vsyncpa [#allocation3], 1
    %s299 = scalar_lea.sflag [#allocation3], 1
    %300 = vsyncpa %s299, 1

</llo_original>
